<compile_context>
chip_gen: v6e
topology: v6e:2x2x1
jax: 0.10.0
libtpu: 0.0.40
codegen_flags: <defaults>
</compile_context>

<pallas_src>
import functools

import jax
import jax.numpy as jnp
from jax import lax
from jax.experimental import pallas as pl
from jax.experimental.pallas import tpu as pltpu


_TB_ROWS_MAX = 2048   # packed rows per grid step (sweepable upward on v6e/v5e)
_CHUNK_ROWS = 128     # packed rows per inner register-resident chunk


def _round_up(x, m):
    return (x + m - 1) // m * m


def _pack_factor(state_dim, hidden_dim):
    """Samples packed per lane-row: grow until packed widths fill an MXU tile (~256)."""
    p = 1
    while p * max(state_dim, hidden_dim) < 256:
        p *= 2
    return p


def _critic_kernel(x_ref, w1_ref, b1_ref, w2_ref, b2_ref, w3_ref, b3_ref, o_ref,
                   *, chunk_rows, num_chunks):
    """Fused packed 3-layer MLP.

    x_ref : [TB, P*S]   f32   packed state tile (streamed)
    w1_ref: [P*S, P*H]  bf16  block-diag layer-1 weight (VMEM resident)
    b1_ref: [1, P*H]    f32
    w2_ref: [P*H, P*H]  bf16  block-diag layer-2 weight (VMEM resident)
    b2_ref: [1, P*H]    f32
    w3_ref: [P*H, P]    bf16  block-diag layer-3 column weights
    b3_ref: [1, 1]      f32   (SMEM scalar)
    o_ref : [TB, P]     f32   packed per-row values
    """
    b3 = b3_ref[0, 0]

    def chunk(c, carry):
        r0 = pl.multiple_of(c * chunk_rows, 8)
        # Per-chunk bf16 cast of the state (keeps the cast off the full-tile path).
        x = x_ref[pl.ds(r0, chunk_rows), :].astype(jnp.bfloat16)
        h1 = jnp.dot(x, w1_ref[...], preferred_element_type=jnp.float32)
        h1 = jnp.maximum(h1 + b1_ref[...], 0.0).astype(jnp.bfloat16)
        h2 = jnp.dot(h1, w2_ref[...], preferred_element_type=jnp.float32)
        h2 = jnp.maximum(h2 + b2_ref[...], 0.0).astype(jnp.bfloat16)
        v = jnp.dot(h2, w3_ref[...], preferred_element_type=jnp.float32) + b3
        o_ref[pl.ds(r0, chunk_rows), :] = v.astype(o_ref.dtype)
        return carry

    lax.fori_loop(0, num_chunks, chunk, None, unroll=True)


def mappo_critic_forward(state, w1, b1, w2, b2, w3, b3):
    """state: [B, state_dim] f32 -> value: [B, 1] f32.

    Params use PyTorch layout: w1 [H,S], b1 [H], w2 [H,H], b2 [H], w3 [1,H], b3 [1].
    """
    B, S = state.shape
    H = w1.shape[0]
    P = _pack_factor(S, H)

    # ---- packed / block-diagonal parameter prep (tiny; fuses under jit) ----
    def blockdiag(m):
        return jax.scipy.linalg.block_diag(*([m] * P))

    w1_bd = blockdiag(w1.T).astype(jnp.bfloat16)              # [P*S, P*H]
    w2_bd = blockdiag(w2.T).astype(jnp.bfloat16)              # [P*H, P*H]
    w3_bd = blockdiag(w3.reshape(H, 1)).astype(jnp.bfloat16)  # [P*H, P]
    b1_p = jnp.tile(b1.reshape(1, H), (1, P)).astype(jnp.float32)  # [1, P*H]
    b2_p = jnp.tile(b2.reshape(1, H), (1, P)).astype(jnp.float32)  # [1, P*H]
    b3_s = jnp.asarray(b3, jnp.float32).reshape(1, 1)

    # ---- batch tiling (packed rows) ----
    rows_raw = pl.cdiv(B, P)
    if rows_raw <= _CHUNK_ROWS:
        tb_rows = _round_up(rows_raw, 8)
        chunk_rows = tb_rows
    else:
        tb_rows = min(_TB_ROWS_MAX, _round_up(rows_raw, _CHUNK_ROWS))
        chunk_rows = _CHUNK_ROWS
    num_chunks = tb_rows // chunk_rows
    rows_pad = _round_up(rows_raw, tb_rows)
    b_pad = rows_pad * P

    x = state.astype(jnp.float32)
    if b_pad != B:
        x = jnp.pad(x, ((0, b_pad - B), (0, 0)))
    x = x.reshape(rows_pad, P * S)   # lane-dense packed state

    kernel = functools.partial(_critic_kernel,
                               chunk_rows=chunk_rows, num_chunks=num_chunks)

    out = pl.pallas_call(
        kernel,
        out_shape=jax.ShapeDtypeStruct((rows_pad, P), jnp.float32),
        grid=(rows_pad // tb_rows,),
        in_specs=[
            pl.BlockSpec((tb_rows, P * S), lambda i: (i, 0)),   # streamed state tiles
            pl.BlockSpec((P * S, P * H), lambda i: (0, 0)),     # weights stay resident
            pl.BlockSpec((1, P * H), lambda i: (0, 0)),
            pl.BlockSpec((P * H, P * H), lambda i: (0, 0)),
            pl.BlockSpec((1, P * H), lambda i: (0, 0)),
            pl.BlockSpec((P * H, P), lambda i: (0, 0)),
            pl.BlockSpec(memory_space=pltpu.MemorySpace.SMEM),  # b3 scalar
        ],
        out_specs=pl.BlockSpec((tb_rows, P), lambda i: (i, 0)),
        compiler_params=pltpu.CompilerParams(
            dimension_semantics=("parallel",),      # megacore split on v7x
            vmem_limit_bytes=32 * 1024 * 1024,
        ),
    )(x, w1_bd, b1_p, w2_bd, b2_p, w3_bd, b3_s)

    return out.reshape(b_pad, 1)[:B]


def _orthogonal(key, shape, gain=1.0):
    """Orthogonal init matching torch.nn.init.orthogonal_ semantics ([out, in])."""
    rows, cols = shape
    a = jax.random.normal(key, (rows, cols), dtype=jnp.float32)
    transposed = rows < cols
    if transposed:
        a = a.T
    q, r = jnp.linalg.qr(a)
    d = jnp.sign(jnp.diagonal(r))
    d = jnp.where(d == 0, 1.0, d)
    q = q * d[None, :]
    if transposed:
        q = q.T
    return gain * q


def init_mappo_critic_params(key, state_dim, hidden_dim):
    k1, k2, k3 = jax.random.split(key, 3)
    # PyTorch layout [out, in]; the wrapper builds the packed/block-diag forms.
    w1 = _orthogonal(k1, (hidden_dim, state_dim))   # [H, S]
    w2 = _orthogonal(k2, (hidden_dim, hidden_dim))  # [H, H]
    w3 = _orthogonal(k3, (1, hidden_dim))           # [1, H]
    b1 = jnp.zeros((hidden_dim,), jnp.float32)
    b2 = jnp.zeros((hidden_dim,), jnp.float32)
    b3 = jnp.zeros((1,), jnp.float32)
    return w1, b1, w2, b2, w3, b3


if __name__ == "__main__":
    state_dim = 16
    hidden_dim = 32
    batch = 8

    key = jax.random.PRNGKey(0)
    k_params, k_state = jax.random.split(key)

    params = init_mappo_critic_params(k_params, state_dim, hidden_dim)
    state = jax.random.normal(k_state, (batch, state_dim), dtype=jnp.float32)

    values = mappo_critic_forward(state, *params)
    values = jax.block_until_ready(values)

    # Pure-JAX f32 reference (same math as the PyTorch module).
    w1, b1, w2, b2, w3, b3 = params
    h1 = jnp.maximum(state @ w1.T + b1, 0.0)
    h2 = jnp.maximum(h1 @ w2.T + b2, 0.0)
    ref = h2 @ w3.T + b3

    assert values.shape == (batch, 1)
    # bf16 matmul operands with f32 accumulation -> tolerance loosened vs f32 reference.
    assert jnp.allclose(values, ref, atol=5e-2, rtol=5e-2), "mismatch vs reference"

    print("KERNEL_OK")
</pallas_src>

<mosaic_0001>
module attributes {stable_mosaic.version = 11 : i64} {
  func.func @_critic_kernel(%arg0: i32, %arg1: memref<8x128xf32, #tpu.memory_space<vmem>>, %arg2: memref<128x256xbf16, #tpu.memory_space<vmem>>, %arg3: memref<1x256xf32, #tpu.memory_space<vmem>>, %arg4: memref<256x256xbf16, #tpu.memory_space<vmem>>, %arg5: memref<1x256xf32, #tpu.memory_space<vmem>>, %arg6: memref<256x8xbf16, #tpu.memory_space<vmem>>, %arg7: memref<1x1xf32, #tpu.memory_space<smem>>, %arg8: memref<8x8xf32, #tpu.memory_space<vmem>>) attributes {dimension_semantics = [#tpu.dimension_semantics<parallel>], iteration_bounds = array<i64: 1>, scalar_prefetch = 0 : i64, scratch_operands = 0 : i64, tpu.core_type = #tpu.core_type<tc>, window_params = [{transform_indices = @transform_0, window_bounds = array<i64: 8, 128>}, {pipeline_mode = #tpu.pipeline_mode<synchronous>, transform_indices = @transform_1, window_bounds = array<i64: 128, 256>}, {pipeline_mode = #tpu.pipeline_mode<synchronous>, transform_indices = @transform_2, window_bounds = array<i64: 1, 256>}, {pipeline_mode = #tpu.pipeline_mode<synchronous>, transform_indices = @transform_3, window_bounds = array<i64: 256, 256>}, {pipeline_mode = #tpu.pipeline_mode<synchronous>, transform_indices = @transform_4, window_bounds = array<i64: 1, 256>}, {pipeline_mode = #tpu.pipeline_mode<synchronous>, transform_indices = @transform_5, window_bounds = array<i64: 256, 8>}, {transform_indices = @transform_6, window_bounds = array<i64: 1, 1>}, {transform_indices = @transform_7, window_bounds = array<i64: 8, 8>}]} {
    %c0 = arith.constant 0 : index
    %c0_0 = arith.constant 0 : index
    %0 = memref.load %arg7[%c0, %c0_0] : memref<1x1xf32, #tpu.memory_space<smem>>
    %c0_i32 = arith.constant 0 : i32
    %c8_i32 = arith.constant 8 : i32
    %1 = arith.muli %c0_i32, %c8_i32 : i32
    %2 = tpu.assume_multiple %1, 8 : i32
    %3 = arith.index_cast %2 : i32 to index
    %c0_1 = arith.constant 0 : index
    %4 = vector.load %arg1[%3, %c0_1] : memref<8x128xf32, #tpu.memory_space<vmem>>, vector<8x128xf32>
    %5 = arith.truncf %4 : vector<8x128xf32> to vector<8x128xbf16>
    %c0_2 = arith.constant 0 : index
    %c0_3 = arith.constant 0 : index
    %6 = vector.load %arg2[%c0_2, %c0_3] : memref<128x256xbf16, #tpu.memory_space<vmem>>, vector<128x256xbf16>
    %cst = arith.constant dense<0.000000e+00> : vector<8x256xf32>
    %7 = tpu.matmul %5, %6, %cst {dimension_numbers = #tpu.dot_dimension_numbers<[1], [0], [0], [1], [0, 0, 1, 1], [], []>} : vector<8x128xbf16>, vector<128x256xbf16>, vector<8x256xf32> -> vector<8x256xf32>
    %c0_4 = arith.constant 0 : index
    %c0_5 = arith.constant 0 : index
    %8 = vector.load %arg3[%c0_4, %c0_5] : memref<1x256xf32, #tpu.memory_space<vmem>>, vector<1x256xf32>
    %9 = vector.broadcast %8 : vector<1x256xf32> to vector<8x256xf32>
    %10 = arith.addf %7, %9 : vector<8x256xf32>
    %cst_6 = arith.constant 0.000000e+00 : f32
    %11 = vector.broadcast %cst_6 : f32 to vector<8x256xf32>
    %12 = arith.maximumf %10, %11 : vector<8x256xf32>
    %13 = arith.truncf %12 : vector<8x256xf32> to vector<8x256xbf16>
    %c0_7 = arith.constant 0 : index
    %c0_8 = arith.constant 0 : index
    %14 = vector.load %arg4[%c0_7, %c0_8] : memref<256x256xbf16, #tpu.memory_space<vmem>>, vector<256x256xbf16>
    %cst_9 = arith.constant dense<0.000000e+00> : vector<8x256xf32>
    %15 = tpu.matmul %13, %14, %cst_9 {dimension_numbers = #tpu.dot_dimension_numbers<[1], [0], [0], [1], [0, 0, 1, 1], [], []>} : vector<8x256xbf16>, vector<256x256xbf16>, vector<8x256xf32> -> vector<8x256xf32>
    %c0_10 = arith.constant 0 : index
    %c0_11 = arith.constant 0 : index
    %16 = vector.load %arg5[%c0_10, %c0_11] : memref<1x256xf32, #tpu.memory_space<vmem>>, vector<1x256xf32>
    %17 = vector.broadcast %16 : vector<1x256xf32> to vector<8x256xf32>
    %18 = arith.addf %15, %17 : vector<8x256xf32>
    %cst_12 = arith.constant 0.000000e+00 : f32
    %19 = vector.broadcast %cst_12 : f32 to vector<8x256xf32>
    %20 = arith.maximumf %18, %19 : vector<8x256xf32>
    %21 = arith.truncf %20 : vector<8x256xf32> to vector<8x256xbf16>
    %c0_13 = arith.constant 0 : index
    %c0_14 = arith.constant 0 : index
    %22 = vector.load %arg6[%c0_13, %c0_14] : memref<256x8xbf16, #tpu.memory_space<vmem>>, vector<256x8xbf16>
    %cst_15 = arith.constant dense<0.000000e+00> : vector<8x8xf32>
    %23 = tpu.matmul %21, %22, %cst_15 {dimension_numbers = #tpu.dot_dimension_numbers<[1], [0], [0], [1], [0, 0, 1, 1], [], []>} : vector<8x256xbf16>, vector<256x8xbf16>, vector<8x8xf32> -> vector<8x8xf32>
    %24 = vector.broadcast %0 : f32 to vector<8x8xf32>
    %25 = arith.addf %23, %24 : vector<8x8xf32>
    %26 = arith.index_cast %2 : i32 to index
    %c0_16 = arith.constant 0 : index
    %27 = vector.load %arg8[%26, %c0_16] : memref<8x8xf32, #tpu.memory_space<vmem>>, vector<8x8xf32>
    tpu.vector_store %arg8[%26, %c0_16], %25 {strides = array<i32>} : memref<8x8xf32, #tpu.memory_space<vmem>>, vector<8x8xf32>,
    %c1_i32 = arith.constant 1 : i32
    return
  }
  func.func @transform_0(%arg0: i32) -> (i32, i32) {
    %c0_i32 = arith.constant 0 : i32
    %c0_i32_0 = arith.constant 0 : i32
    return %arg0, %c0_i32 : i32, i32
  }
  func.func @transform_1(%arg0: i32) -> (i32, i32) {
    %c0_i32 = arith.constant 0 : i32
    %c0_i32_0 = arith.constant 0 : i32
    %c0_i32_1 = arith.constant 0 : i32
    return %c0_i32, %c0_i32_0 : i32, i32
  }
  func.func @transform_2(%arg0: i32) -> (i32, i32) {
    %c0_i32 = arith.constant 0 : i32
    %c0_i32_0 = arith.constant 0 : i32
    %c0_i32_1 = arith.constant 0 : i32
    return %c0_i32, %c0_i32_0 : i32, i32
  }
  func.func @transform_3(%arg0: i32) -> (i32, i32) {
    %c0_i32 = arith.constant 0 : i32
    %c0_i32_0 = arith.constant 0 : i32
    %c0_i32_1 = arith.constant 0 : i32
    return %c0_i32, %c0_i32_0 : i32, i32
  }
  func.func @transform_4(%arg0: i32) -> (i32, i32) {
    %c0_i32 = arith.constant 0 : i32
    %c0_i32_0 = arith.constant 0 : i32
    %c0_i32_1 = arith.constant 0 : i32
    return %c0_i32, %c0_i32_0 : i32, i32
  }
  func.func @transform_5(%arg0: i32) -> (i32, i32) {
    %c0_i32 = arith.constant 0 : i32
    %c0_i32_0 = arith.constant 0 : i32
    %c0_i32_1 = arith.constant 0 : i32
    return %c0_i32, %c0_i32_0 : i32, i32
  }
  func.func @transform_6(%arg0: i32) -> (i32, i32) {
    %c0_i32 = arith.constant 0 : i32
    %c0_i32_0 = arith.constant 0 : i32
    %c0_i32_1 = arith.constant 0 : i32
    return %c0_i32, %c0_i32_0 : i32, i32
  }
  func.func @transform_7(%arg0: i32) -> (i32, i32) {
    %c0_i32 = arith.constant 0 : i32
    %c0_i32_0 = arith.constant 0 : i32
    return %arg0, %c0_i32 : i32, i32
  }
}

</mosaic_0001>

<llo_original>
// kernel: tpu_custom_call.1
$region0: #{tpu_custom_call.1}
  #allocation0 [shape = 'u32[]', space=smem, size = 0x4, offset = 0x4, fixed_abs, tag = 'smem constant byte address 0x4 - core index']
  #allocation1 [shape = 'u32[144,128]{1,0:T(1,128)}', space=vmem, size = 0x12000, scoped, tag = 'internal scratch']
  #allocation2 [shape = 'f32[1,1]{1,0:T(1,128)S(6)}', space=smem, size = 0x200, scoped, tag = 'scoped memory for tpu_custom_call.1']
  %s0 = inlined_call_operand.vmem [shape: f32[8,128], index: 0, kind: input, shape index: {}]
  %s1 = inlined_call_operand.vmem [shape: bf16[128,256], index: 1, kind: input, shape index: {}]
  %s2 = inlined_call_operand.vmem [shape: f32[1,256], index: 2, kind: input, shape index: {}]
  %s3 = inlined_call_operand.hbm [shape: bf16[256,256], index: 3, kind: input, shape index: {}]
  %s4 = inlined_call_operand.hbm [shape: f32[1,256], index: 4, kind: input, shape index: {}]
  %s5 = inlined_call_operand.vmem [shape: bf16[256,8], index: 5, kind: input, shape index: {}]
  %s6 = inlined_call_operand.<no memory space> [shape: f32[1,1], index: 6, kind: input, shape index: {}]
  %s7 = inlined_call_operand.hbm [shape: f32[8,8], index: 7, kind: output, shape index: {}]
  %s8 = sld [smem:[#allocation0]]
  $region46: #{tpu_custom_call.1} parent=0
    _
  %s10 = ssub.s32 1, %s8
  %s11 = scalar_select 0, %s10, %s8
  %12 = sst [smem:[#allocation2]] %s6
  $region1: #{tpu_custom_call.1} parent=0
    #allocation3 [shape = 'u8[131072]{0}', space=vmem, size = 0x20000, scoped, tag = 'input window, operand 3, single buffered']
    #allocation4 [shape = 's32[1]{0}', space=sflag, size = 0x4, scoped, tag = 'scoped memory for tpu_custom_call.1']
    #allocation5 [shape = 's32[1]{0}', space=sflag, size = 0x4, scoped, tag = 'scoped memory for tpu_custom_call.1']
    #allocation6 [shape = 'u8[1024]{0}', space=vmem, size = 0x400, scoped, tag = 'input window, operand 4, single buffered']
    #allocation7 [shape = 's32[1]{0}', space=sflag, size = 0x4, scoped, tag = 'scoped memory for tpu_custom_call.1']
    #allocation8 [shape = 'u8[4096]{0}', space=vmem, size = 0x1000, scoped, tag = 'output window, operand 0, single buffered']
    %13 = vsyncpa [#allocation4], 0
    %14 = vsyncpa [#allocation7], 0
    %15 = vsyncpa [#allocation5], 0
    // Predicated region
    $region2: #{tpu_custom_call.1} parent=1 // pred_check
      _
    $region3: #{tpu_custom_call.1} parent=1 // pred_check_branch
      %17 = sbr.rel (0) target = $region5
    $region4: #{tpu_custom_call.1} parent=1 // pred_region
      _
    $region5: #{tpu_custom_call.1} parent=1 // pred_fallthru
      _
    // Predicated region
    $region6: #{tpu_custom_call.1} parent=1 // pred_check
      _
    $region7: #{tpu_custom_call.1} parent=1 // pred_check_branch
      %19 = sbr.rel (0) target = $region9
    $region8: #{tpu_custom_call.1} parent=1 // pred_region
      _
    $region9: #{tpu_custom_call.1} parent=1 // pred_fallthru
      _
    // Predicated region
    $region10: #{tpu_custom_call.1} parent=1 // pred_check
      _
    $region11: #{tpu_custom_call.1} parent=1 // pred_check_branch
      %21 = sbr.rel (0) target = $region13
    $region12: #{tpu_custom_call.1} parent=1 // pred_region
      _
    $region13: #{tpu_custom_call.1} parent=1 // pred_fallthru
      _
    // Predicated region
    $region14: #{tpu_custom_call.1} parent=1 // pred_check
      _
    $region15: #{tpu_custom_call.1} parent=1 // pred_check_branch
      %23 = sbr.rel (0) target = $region17
    $region16: #{tpu_custom_call.1} parent=1 // pred_region
      %s25 = ssub.s32 4096, 4096
      %26 = vsyncadd [#allocation4], %s25
      %s27 = sshll.u32 [#allocation3], 4
      %s28 = int_to_ptr.vmem [resolvable:$true] %s27
      %33 = dma.hbm_to_vmem [thread:$0]  %s3, 4096, %s28, [#allocation4], 128, 128, 8
    $region17: #{tpu_custom_call.1} parent=1 // pred_fallthru
      _
    // Predicated region
    $region18: #{tpu_custom_call.1} parent=1 // pred_check
      _
    $region19: #{tpu_custom_call.1} parent=1 // pred_check_branch
      %35 = sbr.rel (0) target = $region21
    $region20: #{tpu_custom_call.1} parent=1 // pred_region
      %s37 = ssub.s32 32, 32
      %38 = vsyncadd [#allocation7], %s37
      %s40 = sshll.u32 [#allocation6], 4
      %s41 = int_to_ptr.vmem [resolvable:$true] %s40
      %43 = dma.hbm_to_vmem [thread:$0]  %s4, 32, %s41, [#allocation7]
    $region21: #{tpu_custom_call.1} parent=1 // pred_fallthru
      _
    // Predicated region
    $region22: #{tpu_custom_call.1} parent=1 // pred_check
      _
    $region23: #{tpu_custom_call.1} parent=1 // pred_check_branch
      %45 = sbr.rel (0) target = $region25
    $region24: #{tpu_custom_call.1} parent=1 // pred_region
      _
    $region25: #{tpu_custom_call.1} parent=1 // pred_fallthru
      _
    // Predicated region
    $region26: #{tpu_custom_call.1} parent=1 // pred_check
      _
    $region27: #{tpu_custom_call.1} parent=1 // pred_check_branch
      %47 = sbr.rel (0) target = $region29
    $region28: #{tpu_custom_call.1} parent=1 // pred_region
      _
    $region29: #{tpu_custom_call.1} parent=1 // pred_fallthru
      _
    // Predicated region
    $region30: #{tpu_custom_call.1} parent=1 // pred_check
      _
    $region31: #{tpu_custom_call.1} parent=1 // pred_check_branch
      %49 = sbr.rel (0) target = $region33
    $region32: #{tpu_custom_call.1} parent=1 // pred_region
      %50 = dma.done [#allocation4], 4096
    $region33: #{tpu_custom_call.1} parent=1 // pred_fallthru
      _
    // Predicated region
    $region34: #{tpu_custom_call.1} parent=1 // pred_check
      _
    $region35: #{tpu_custom_call.1} parent=1 // pred_check_branch
      %52 = sbr.rel (0) target = $region37
    $region36: #{tpu_custom_call.1} parent=1 // pred_region
      %53 = dma.done [#allocation7], 32
    $region37: #{tpu_custom_call.1} parent=1 // pred_fallthru
      _
    %s55 = sld [smem:[#allocation2]]
    %v56 = vld [vmem:[%s0] sm:$0xff]
    %v57 = vpack.c.bf16 %v56, %v56
    %v58 = vld [vmem:[%s1] sm:$0xff]
    %v59 = vld [vmem:[%s1 + $0x8] sm:$0xff]
    %v60 = vld [vmem:[%s1 + $0x10] sm:$0xff]
    %v61 = vld [vmem:[%s1 + $0x18] sm:$0xff]
    %v62 = vld [vmem:[%s1 + $0x20] sm:$0xff]
    %v63 = vld [vmem:[%s1 + $0x28] sm:$0xff]
    %v64 = vld [vmem:[%s1 + $0x30] sm:$0xff]
    %v65 = vld [vmem:[%s1 + $0x38] sm:$0xff]
    %v66 = vld [vmem:[%s1 + $0x40] sm:$0xff]
    %v67 = vld [vmem:[%s1 + $0x48] sm:$0xff]
    %v68 = vld [vmem:[%s1 + $0x50] sm:$0xff]
    %v69 = vld [vmem:[%s1 + $0x58] sm:$0xff]
    %v70 = vld [vmem:[%s1 + $0x60] sm:$0xff]
    %v71 = vld [vmem:[%s1 + $0x68] sm:$0xff]
    %v72 = vld [vmem:[%s1 + $0x70] sm:$0xff]
    %v73 = vld [vmem:[%s1 + $0x78] sm:$0xff]
    %v74 = vld [vmem:[%s2] sm:$0x3]
    %v76 = vlaneseq
    %v77 = vshrl.u32 %v76, 7
    %v78 = vsub.s32 0, %v77
    %v79 = vrot.slane %v74, %v78
    %v80 = vlaneseq
    %v81 = vshrl.u32 %v80, 7
    %v82 = vsub.s32 1, %v81
    %v83 = vrot.slane %v74, %v82
    %v102 = vunpack.c.l.b16 %v58
    %v103 = vunpack.c.h.b16 %v58
    %v104 = vunpack.c.l.b16 %v59
    %v105 = vunpack.c.h.b16 %v59
    %v106 = vunpack.c.l.b16 %v60
    %v107 = vunpack.c.h.b16 %v60
    %v108 = vunpack.c.l.b16 %v61
    %v109 = vunpack.c.h.b16 %v61
    %v110 = vunpack.c.l.b16 %v62
    %v111 = vunpack.c.h.b16 %v62
    %v112 = vunpack.c.l.b16 %v63
    %v113 = vunpack.c.h.b16 %v63
    %v114 = vunpack.c.l.b16 %v64
    %v115 = vunpack.c.h.b16 %v64
    %v116 = vunpack.c.l.b16 %v65
    %v117 = vunpack.c.h.b16 %v65
    %v118 = vunpack.c.l.b16 %v66
    %v119 = vunpack.c.h.b16 %v66
    %v120 = vunpack.c.l.b16 %v67
    %v121 = vunpack.c.h.b16 %v67
    %v122 = vunpack.c.l.b16 %v68
    %v123 = vunpack.c.h.b16 %v68
    %v124 = vunpack.c.l.b16 %v69
    %v125 = vunpack.c.h.b16 %v69
    %v126 = vunpack.c.l.b16 %v70
    %v127 = vunpack.c.h.b16 %v70
    %v128 = vunpack.c.l.b16 %v71
    %v129 = vunpack.c.h.b16 %v71
    %v130 = vunpack.c.l.b16 %v72
    %v131 = vunpack.c.h.b16 %v72
    %v132 = vunpack.c.l.b16 %v73
    %v133 = vunpack.c.h.b16 %v73
    %v134 = vpack.c.b16 %v104, %v102
    %v135 = vpack.c.b16 %v105, %v103
    %v136 = vpack.c.b16 %v108, %v106
    %v137 = vpack.c.b16 %v109, %v107
    %v138 = vpack.c.b16 %v112, %v110
    %v139 = vpack.c.b16 %v113, %v111
    %v140 = vpack.c.b16 %v116, %v114
    %v141 = vpack.c.b16 %v117, %v115
    %v142 = vpack.c.b16 %v120, %v118
    %v143 = vpack.c.b16 %v121, %v119
    %v144 = vpack.c.b16 %v124, %v122
    %v145 = vpack.c.b16 %v125, %v123
    %v146 = vpack.c.b16 %v128, %v126
    %v147 = vpack.c.b16 %v129, %v127
    %v148 = vpack.c.b16 %v132, %v130
    %v149 = vpack.c.b16 %v133, %v131
    %166 = vmatprep.subr.bf16.mxu0 %v149
    %167 = vmatpush1.bf16.msra.mxu0 %v148
    %168 = vmatprep.subr.bf16.mxu0 %v147
    %169 = vmatpush1.bf16.msra.mxu0 %v146
    %170 = vmatprep.subr.bf16.mxu0 %v145
    %171 = vmatpush1.bf16.msra.mxu0 %v144
    %172 = vmatprep.subr.bf16.mxu0 %v143
    %173 = vmatpush1.bf16.msra.mxu0 %v142
    %174 = vmatprep.subr.bf16.mxu0 %v141
    %175 = vmatpush1.bf16.msra.mxu0 %v140
    %176 = vmatprep.subr.bf16.mxu0 %v139
    %177 = vmatpush1.bf16.msra.mxu0 %v138
    %178 = vmatprep.subr.bf16.mxu0 %v137
    %179 = vmatpush1.bf16.msra.mxu0 %v136
    %180 = vmatprep.subr.bf16.mxu0 %v135
    %181 = vmatpush1.bf16.msra.mxu0 %v134
    %182 = vmatprep.subr.bf16.mxu0 0
    %183 = vmatpush2.bf16.msra.mxu0 0
    %184 = vmatprep.subr.bf16.mxu0 0
    %185 = vmatpush2.bf16.msra.mxu0 0
    %186 = vmatprep.subr.bf16.mxu0 0
    %187 = vmatpush2.bf16.msra.mxu0 0
    %188 = vmatprep.subr.bf16.mxu0 0
    %189 = vmatpush2.bf16.msra.mxu0 0
    %190 = vmatprep.subr.bf16.mxu0 0
    %191 = vmatpush2.bf16.msra.mxu0 0
    %192 = vmatprep.subr.bf16.mxu0 0
    %193 = vmatpush2.bf16.msra.mxu0 0
    %194 = vmatprep.subr.bf16.mxu0 0
    %195 = vmatpush2.bf16.msra.mxu0 0
    %196 = vmatprep.subr.bf16.mxu0 0
    %197 = vmatpush2.bf16.msra.mxu0 0
    %198 = vmatprep.mubr.bf16.mxu0 0
    %199 = vmatmul.mubr.bf16.gmra.mxu0 %v57
    %v200 = vpop.f32.mrf.mxu0
    %v201 = vadd.f32 %v79, %v200
    %v202 = vpop.f32.mrf.mxu0
    %v203 = vadd.f32 %v83, %v202
    %v204 = vpop.f32.mrf.mxu0
    %v205 = vpop.f32.mrf.mxu0
    %206 = vdwg.mxu0
    %v207 = vmax.f32 %v201, 0.0
    %v208 = vmax.f32 %v203, 0.0
    %v209 = vpack.c.bf16 %v207, %v207
    %v210 = vpack.c.bf16 %v208, %v208
    %v211 = vld [vmem:[#allocation3] sm:$0xff]
    %v212 = vld [vmem:[#allocation3 + $0x8] sm:$0xff]
    %v213 = vld [vmem:[#allocation3 + $0x10] sm:$0xff]
    %v214 = vld [vmem:[#allocation3 + $0x18] sm:$0xff]
    %v215 = vld [vmem:[#allocation3 + $0x20] sm:$0xff]
    %v216 = vld [vmem:[#allocation3 + $0x28] sm:$0xff]
    %v217 = vld [vmem:[#allocation3 + $0x30] sm:$0xff]
    %v218 = vld [vmem:[#allocation3 + $0x38] sm:$0xff]
    %v219 = vld [vmem:[#allocation3 + $0x40] sm:$0xff]
    %v220 = vld [vmem:[#allocation3 + $0x48] sm:$0xff]
    %v221 = vld [vmem:[#allocation3 + $0x50] sm:$0xff]
    %v222 = vld [vmem:[#allocation3 + $0x58] sm:$0xff]
    %v223 = vld [vmem:[#allocation3 + $0x60] sm:$0xff]
    %v224 = vld [vmem:[#allocation3 + $0x68] sm:$0xff]
    %v225 = vld [vmem:[#allocation3 + $0x70] sm:$0xff]
    %v226 = vld [vmem:[#allocation3 + $0x78] sm:$0xff]
    %v227 = vld [vmem:[#allocation3 + $0x80] sm:$0xff]
    %v228 = vld [vmem:[#allocation3 + $0x88] sm:$0xff]
    %v229 = vld [vmem:[#allocation3 + $0x90] sm:$0xff]
    %v230 = vld [vmem:[#allocation3 + $0x98] sm:$0xff]
    %v231 = vld [vmem:[#allocation3 + $0xa0] sm:$0xff]
    %v232 = vld [vmem:[#allocation3 + $0xa8] sm:$0xff]
    %v233 = vld [vmem:[#allocation3 + $0xb0] sm:$0xff]
    %v234 = vld [vmem:[#allocation3 + $0xb8] sm:$0xff]
    %v235 = vld [vmem:[#allocation3 + $0xc0] sm:$0xff]
    %v236 = vld [vmem:[#allocation3 + $0xc8] sm:$0xff]
    %v237 = vld [vmem:[#allocation3 + $0xd0] sm:$0xff]
    %v238 = vld [vmem:[#allocation3 + $0xd8] sm:$0xff]
    %v239 = vld [vmem:[#allocation3 + $0xe0] sm:$0xff]
    %v240 = vld [vmem:[#allocation3 + $0xe8] sm:$0xff]
    %v241 = vld [vmem:[#allocation3 + $0xf0] sm:$0xff]
    %v242 = vld [vmem:[#allocation3 + $0xf8] sm:$0xff]
    %v243 = vld [vmem:[#allocation6] sm:$0x3]
    %v245 = vlaneseq
    %v246 = vshrl.u32 %v245, 7
    %v247 = vsub.s32 0, %v246
    %v248 = vrot.slane %v243, %v247
    %v249 = vlaneseq
    %v250 = vshrl.u32 %v249, 7
    %v251 = vsub.s32 1, %v250
    %v252 = vrot.slane %v243, %v251
    %v287 = vunpack.c.l.b16 %v211
    %v288 = vunpack.c.h.b16 %v211
    %v289 = vunpack.c.l.b16 %v212
    %v290 = vunpack.c.h.b16 %v212
    %v291 = vunpack.c.l.b16 %v213
    %v292 = vunpack.c.h.b16 %v213
    %v293 = vunpack.c.l.b16 %v214
    %v294 = vunpack.c.h.b16 %v214
    %v295 = vunpack.c.l.b16 %v215
    %v296 = vunpack.c.h.b16 %v215
    %v297 = vunpack.c.l.b16 %v216
    %v298 = vunpack.c.h.b16 %v216
    %v299 = vunpack.c.l.b16 %v217
    %v300 = vunpack.c.h.b16 %v217
    %v301 = vunpack.c.l.b16 %v218
    %v302 = vunpack.c.h.b16 %v218
    %v303 = vunpack.c.l.b16 %v219
    %v304 = vunpack.c.h.b16 %v219
    %v305 = vunpack.c.l.b16 %v220
    %v306 = vunpack.c.h.b16 %v220
    %v307 = vunpack.c.l.b16 %v221
    %v308 = vunpack.c.h.b16 %v221
    %v309 = vunpack.c.l.b16 %v222
    %v310 = vunpack.c.h.b16 %v222
    %v311 = vunpack.c.l.b16 %v223
    %v312 = vunpack.c.h.b16 %v223
    %v313 = vunpack.c.l.b16 %v224
    %v314 = vunpack.c.h.b16 %v224
    %v315 = vunpack.c.l.b16 %v225
    %v316 = vunpack.c.h.b16 %v225
    %v317 = vunpack.c.l.b16 %v226
    %v318 = vunpack.c.h.b16 %v226
    %v319 = vunpack.c.l.b16 %v227
    %v320 = vunpack.c.h.b16 %v227
    %v321 = vunpack.c.l.b16 %v228
    %v322 = vunpack.c.h.b16 %v228
    %v323 = vunpack.c.l.b16 %v229
    %v324 = vunpack.c.h.b16 %v229
    %v325 = vunpack.c.l.b16 %v230
    %v326 = vunpack.c.h.b16 %v230
    %v327 = vunpack.c.l.b16 %v231
    %v328 = vunpack.c.h.b16 %v231
    %v329 = vunpack.c.l.b16 %v232
    %v330 = vunpack.c.h.b16 %v232
    %v331 = vunpack.c.l.b16 %v233
    %v332 = vunpack.c.h.b16 %v233
    %v333 = vunpack.c.l.b16 %v234
    %v334 = vunpack.c.h.b16 %v234
    %v335 = vunpack.c.l.b16 %v235
    %v336 = vunpack.c.h.b16 %v235
    %v337 = vunpack.c.l.b16 %v236
    %v338 = vunpack.c.h.b16 %v236
    %v339 = vunpack.c.l.b16 %v237
    %v340 = vunpack.c.h.b16 %v237
    %v341 = vunpack.c.l.b16 %v238
    %v342 = vunpack.c.h.b16 %v238
    %v343 = vunpack.c.l.b16 %v239
    %v344 = vunpack.c.h.b16 %v239
    %v345 = vunpack.c.l.b16 %v240
    %v346 = vunpack.c.h.b16 %v240
    %v347 = vunpack.c.l.b16 %v241
    %v348 = vunpack.c.h.b16 %v241
    %v349 = vunpack.c.l.b16 %v242
    %v350 = vunpack.c.h.b16 %v242
    %v351 = vpack.c.b16 %v289, %v287
    %v352 = vpack.c.b16 %v290, %v288
    %v353 = vpack.c.b16 %v293, %v291
    %v354 = vpack.c.b16 %v294, %v292
    %v355 = vpack.c.b16 %v297, %v295
    %v356 = vpack.c.b16 %v298, %v296
    %v357 = vpack.c.b16 %v301, %v299
    %v358 = vpack.c.b16 %v302, %v300
    %v359 = vpack.c.b16 %v305, %v303
    %v360 = vpack.c.b16 %v306, %v304
    %v361 = vpack.c.b16 %v309, %v307
    %v362 = vpack.c.b16 %v310, %v308
    %v363 = vpack.c.b16 %v313, %v311
    %v364 = vpack.c.b16 %v314, %v312
    %v365 = vpack.c.b16 %v317, %v315
    %v366 = vpack.c.b16 %v318, %v316
    %v367 = vpack.c.b16 %v321, %v319
    %v368 = vpack.c.b16 %v322, %v320
    %v369 = vpack.c.b16 %v325, %v323
    %v370 = vpack.c.b16 %v326, %v324
    %v371 = vpack.c.b16 %v329, %v327
    %v372 = vpack.c.b16 %v330, %v328
    %v373 = vpack.c.b16 %v333, %v331
    %v374 = vpack.c.b16 %v334, %v332
    %v375 = vpack.c.b16 %v337, %v335
    %v376 = vpack.c.b16 %v338, %v336
    %v377 = vpack.c.b16 %v341, %v339
    %v378 = vpack.c.b16 %v342, %v340
    %v379 = vpack.c.b16 %v345, %v343
    %v380 = vpack.c.b16 %v346, %v344
    %v381 = vpack.c.b16 %v349, %v347
    %v382 = vpack.c.b16 %v350, %v348
    %415 = vmatprep.subr.bf16.mxu0 %v366
    %416 = vmatpush1.bf16.msra.mxu0 %v365
    %417 = vmatprep.subr.bf16.mxu0 %v364
    %418 = vmatpush1.bf16.msra.mxu0 %v363
    %419 = vmatprep.subr.bf16.mxu0 %v362
    %420 = vmatpush1.bf16.msra.mxu0 %v361
    %421 = vmatprep.subr.bf16.mxu0 %v360
    %422 = vmatpush1.bf16.msra.mxu0 %v359
    %423 = vmatprep.subr.bf16.mxu0 %v358
    %424 = vmatpush1.bf16.msra.mxu0 %v357
    %425 = vmatprep.subr.bf16.mxu0 %v356
    %426 = vmatpush1.bf16.msra.mxu0 %v355
    %427 = vmatprep.subr.bf16.mxu0 %v354
    %428 = vmatpush1.bf16.msra.mxu0 %v353
    %429 = vmatprep.subr.bf16.mxu0 %v352
    %430 = vmatpush1.bf16.msra.mxu0 %v351
    %431 = vmatprep.subr.bf16.mxu0 %v382
    %432 = vmatpush2.bf16.msra.mxu0 %v381
    %433 = vmatprep.subr.bf16.mxu0 %v380
    %434 = vmatpush2.bf16.msra.mxu0 %v379
    %435 = vmatprep.subr.bf16.mxu0 %v378
    %436 = vmatpush2.bf16.msra.mxu0 %v377
    %437 = vmatprep.subr.bf16.mxu0 %v376
    %438 = vmatpush2.bf16.msra.mxu0 %v375
    %439 = vmatprep.subr.bf16.mxu0 %v374
    %440 = vmatpush2.bf16.msra.mxu0 %v373
    %441 = vmatprep.subr.bf16.mxu0 %v372
    %442 = vmatpush2.bf16.msra.mxu0 %v371
    %443 = vmatprep.subr.bf16.mxu0 %v370
    %444 = vmatpush2.bf16.msra.mxu0 %v369
    %445 = vmatprep.subr.bf16.mxu0 %v368
    %446 = vmatpush2.bf16.msra.mxu0 %v367
    %447 = vmatprep.mubr.bf16.mxu0 %v210
    %448 = vmatmul.mubr.bf16.gmra.mxu0 %v209
    %v449 = vpop.f32.mrf.mxu0
    %v450 = vadd.f32 %v248, %v449
    %v451 = vpop.f32.mrf.mxu0
    %v452 = vadd.f32 %v252, %v451
    %v453 = vpop.f32.mrf.mxu0
    %v454 = vpop.f32.mrf.mxu0
    %455 = vdwg.mxu0
    %v456 = vmax.f32 %v450, 0.0
    %v457 = vmax.f32 %v452, 0.0
    %v458 = vpack.c.bf16 %v456, %v456
    %v459 = vpack.c.bf16 %v457, %v457
    %v460 = vld [vmem:[%s5] sm:$0xf]
    %v461 = vld [vmem:[%s5 + $0x4] sm:$0xf]
    %v462 = vld [vmem:[%s5 + $0x8] sm:$0xf]
    %v463 = vld [vmem:[%s5 + $0xc] sm:$0xf]
    %v464 = vld [vmem:[%s5 + $0x10] sm:$0xf]
    %v465 = vld [vmem:[%s5 + $0x14] sm:$0xf]
    %v466 = vld [vmem:[%s5 + $0x18] sm:$0xf]
    %v467 = vld [vmem:[%s5 + $0x1c] sm:$0xf]
    %v468 = vld [vmem:[%s5 + $0x20] sm:$0xf]
    %v469 = vld [vmem:[%s5 + $0x24] sm:$0xf]
    %v470 = vld [vmem:[%s5 + $0x28] sm:$0xf]
    %v471 = vld [vmem:[%s5 + $0x2c] sm:$0xf]
    %v472 = vld [vmem:[%s5 + $0x30] sm:$0xf]
    %v473 = vld [vmem:[%s5 + $0x34] sm:$0xf]
    %v474 = vld [vmem:[%s5 + $0x38] sm:$0xf]
    %v475 = vld [vmem:[%s5 + $0x3c] sm:$0xf]
    %v476 = vld [vmem:[%s5 + $0x40] sm:$0xf]
    %v477 = vld [vmem:[%s5 + $0x44] sm:$0xf]
    %v478 = vld [vmem:[%s5 + $0x48] sm:$0xf]
    %v479 = vld [vmem:[%s5 + $0x4c] sm:$0xf]
    %v480 = vld [vmem:[%s5 + $0x50] sm:$0xf]
    %v481 = vld [vmem:[%s5 + $0x54] sm:$0xf]
    %v482 = vld [vmem:[%s5 + $0x58] sm:$0xf]
    %v483 = vld [vmem:[%s5 + $0x5c] sm:$0xf]
    %v484 = vld [vmem:[%s5 + $0x60] sm:$0xf]
    %v485 = vld [vmem:[%s5 + $0x64] sm:$0xf]
    %v486 = vld [vmem:[%s5 + $0x68] sm:$0xf]
    %v487 = vld [vmem:[%s5 + $0x6c] sm:$0xf]
    %v488 = vld [vmem:[%s5 + $0x70] sm:$0xf]
    %v489 = vld [vmem:[%s5 + $0x74] sm:$0xf]
    %v490 = vld [vmem:[%s5 + $0x78] sm:$0xf]
    %v491 = vld [vmem:[%s5 + $0x7c] sm:$0xf]
    %v492 = vstv %s55
    %v525 = vunpack.c.l.b16 %v460
    %v526 = vunpack.c.l.b16 %v461
    %v527 = vunpack.c.l.b16 %v462
    %v528 = vunpack.c.l.b16 %v463
    %v529 = vunpack.c.l.b16 %v464
    %v530 = vunpack.c.l.b16 %v465
    %v531 = vunpack.c.l.b16 %v466
    %v532 = vunpack.c.l.b16 %v467
    %v533 = vunpack.c.l.b16 %v468
    %v534 = vunpack.c.l.b16 %v469
    %v535 = vunpack.c.l.b16 %v470
    %v536 = vunpack.c.l.b16 %v471
    %v537 = vunpack.c.l.b16 %v472
    %v538 = vunpack.c.l.b16 %v473
    %v539 = vunpack.c.l.b16 %v474
    %v540 = vunpack.c.l.b16 %v475
    %v541 = vunpack.c.l.b16 %v476
    %v542 = vunpack.c.l.b16 %v477
    %v543 = vunpack.c.l.b16 %v478
    %v544 = vunpack.c.l.b16 %v479
    %v545 = vunpack.c.l.b16 %v480
    %v546 = vunpack.c.l.b16 %v481
    %v547 = vunpack.c.l.b16 %v482
    %v548 = vunpack.c.l.b16 %v483
    %v549 = vunpack.c.l.b16 %v484
    %v550 = vunpack.c.l.b16 %v485
    %v551 = vunpack.c.l.b16 %v486
    %v552 = vunpack.c.l.b16 %v487
    %v553 = vunpack.c.l.b16 %v488
    %v554 = vunpack.c.l.b16 %v489
    %v555 = vunpack.c.l.b16 %v490
    %v556 = vunpack.c.l.b16 %v491
    %v557 = vpack.c.b16 %v526, %v525
    %v558 = vpack.c.b16 %v528, %v527
    %v559 = vpack.c.b16 %v530, %v529
    %v560 = vpack.c.b16 %v532, %v531
    %v561 = vpack.c.b16 %v534, %v533
    %v562 = vpack.c.b16 %v536, %v535
    %v563 = vpack.c.b16 %v538, %v537
    %v564 = vpack.c.b16 %v540, %v539
    %v565 = vpack.c.b16 %v542, %v541
    %v566 = vpack.c.b16 %v544, %v543
    %v567 = vpack.c.b16 %v546, %v545
    %v568 = vpack.c.b16 %v548, %v547
    %v569 = vpack.c.b16 %v550, %v549
    %v570 = vpack.c.b16 %v552, %v551
    %v571 = vpack.c.b16 %v554, %v553
    %v572 = vpack.c.b16 %v556, %v555
    %589 = vmatprep.subr.bf16.mxu0 0
    %590 = vmatpush1.bf16.msra.mxu0 %v564
    %591 = vmatprep.subr.bf16.mxu0 0
    %592 = vmatpush1.bf16.msra.mxu0 %v563
    %593 = vmatprep.subr.bf16.mxu0 0
    %594 = vmatpush1.bf16.msra.mxu0 %v562
    %595 = vmatprep.subr.bf16.mxu0 0
    %596 = vmatpush1.bf16.msra.mxu0 %v561
    %597 = vmatprep.subr.bf16.mxu0 0
    %598 = vmatpush1.bf16.msra.mxu0 %v560
    %599 = vmatprep.subr.bf16.mxu0 0
    %600 = vmatpush1.bf16.msra.mxu0 %v559
    %601 = vmatprep.subr.bf16.mxu0 0
    %602 = vmatpush1.bf16.msra.mxu0 %v558
    %603 = vmatprep.subr.bf16.mxu0 0
    %604 = vmatpush1.bf16.msra.mxu0 %v557
    %605 = vmatprep.subr.bf16.mxu0 0
    %606 = vmatpush2.bf16.msra.mxu0 %v572
    %607 = vmatprep.subr.bf16.mxu0 0
    %608 = vmatpush2.bf16.msra.mxu0 %v571
    %609 = vmatprep.subr.bf16.mxu0 0
    %610 = vmatpush2.bf16.msra.mxu0 %v570
    %611 = vmatprep.subr.bf16.mxu0 0
    %612 = vmatpush2.bf16.msra.mxu0 %v569
    %613 = vmatprep.subr.bf16.mxu0 0
    %614 = vmatpush2.bf16.msra.mxu0 %v568
    %615 = vmatprep.subr.bf16.mxu0 0
    %616 = vmatpush2.bf16.msra.mxu0 %v567
    %617 = vmatprep.subr.bf16.mxu0 0
    %618 = vmatpush2.bf16.msra.mxu0 %v566
    %619 = vmatprep.subr.bf16.mxu0 0
    %620 = vmatpush2.bf16.msra.mxu0 %v565
    %621 = vmatprep.mubr.bf16.mxu0 %v459
    %622 = vmatmul.mubr.bf16.gmra.mxu0 %v458
    %v623 = vpop.f32.mrf.mxu0
    %v624 = vadd.f32 %v492, %v623
    %v625 = vpop.f32.mrf.mxu0
    %v626 = vpop.f32.mrf.mxu0
    %v627 = vpop.f32.mrf.mxu0
    %628 = vdwg.mxu0
    %vm629 = vcmask 64512
    %630 = vst.msk [vmem:[#allocation8] sm:$0xff] %vm629, %v624
    // Predicated region
    $region38: #{tpu_custom_call.1} parent=1 // pred_check
      _
    $region39: #{tpu_custom_call.1} parent=1 // pred_check_branch
      %632 = sbr.rel (0) target = $region41
    $region40: #{tpu_custom_call.1} parent=1 // pred_region
      %s634 = ssub.s32 128, 128
      %635 = vsyncadd [#allocation5], %s634
      %s637 = sshll.u32 [#allocation8], 4
      %s638 = int_to_ptr.vmem [resolvable:$true] %s637
      %640 = dma.vmem_to_hbm [thread:$0]  %s638, 128, %s7, [#allocation5]
    $region41: #{tpu_custom_call.1} parent=1 // pred_fallthru
      _
    // Predicated region
    $region42: #{tpu_custom_call.1} parent=1 // pred_check
      _
    $region43: #{tpu_custom_call.1} parent=1 // pred_check_branch
      %642 = sbr.rel (0) target = $region45
    $region44: #{tpu_custom_call.1} parent=1 // pred_region
      %643 = dma.done [#allocation5], 128
    $region45: #{tpu_custom_call.1} parent=1 // pred_fallthru
      _
    %644 = vsyncpa [#allocation4], 1
    %645 = vsyncpa [#allocation7], 1
    %646 = vsyncpa [#allocation5], 1

</llo_original>
